<compile_context>
chip_gen: v5e
topology: v5e:2x2
jax: 0.10.0
libtpu: 0.0.40
codegen_flags: <defaults>
</compile_context>

<pallas_src>
import math

import jax
import jax.numpy as jnp
from jax.experimental import pallas as pl
from jax.experimental.pallas import tpu as pltpu


def _lstm_attention_kernel(x_ref, h_ijprev_ref, h_iprev_j_ref,
                           c_iprev_j_ref, c_ijprev_ref,
                           wx_ref, whi_ref, whj_ref, b_ref,
                           h_out_ref, c_out_ref):
    """One batch tile: 3 MXU dots -> f32 preact -> gates -> cell update.

    x_ref        : [bb, D]    input activations            (f32)
    h_ijprev_ref : [bb, H]    hidden state (j-1)           (f32)
    h_iprev_j_ref: [bb, H]    hidden state (i-1)           (f32)
    c_iprev_j_ref: [bb, H]    cell state (i-1)             (f32)
    c_ijprev_ref : [bb, H]    cell state (j-1)             (f32)
    wx_ref       : [D, 5H]    i2h weight, transposed       (compute dtype)
    whi_ref      : [H, 5H]    h2h_i weight, transposed     (compute dtype)
    whj_ref      : [H, 5H]    h2h_j weight, transposed     (compute dtype)
    b_ref        : [1, 5H]    folded bias                  (f32)
    h_out_ref    : [bb, H]    h_ij output                  (f32)
    c_out_ref    : [bb, H]    c_ij output                  (f32)
    """
    H = h_out_ref.shape[-1]
    cdt = wx_ref.dtype  # matmul compute dtype (f32, or bf16 on v5e/v6e/v7x)

    # Three MXU accumulations into one f32 preactivation (no wrapper concat).
    preact = jnp.dot(x_ref[...].astype(cdt), wx_ref[...],
                     preferred_element_type=jnp.float32)
    preact = preact + jnp.dot(h_ijprev_ref[...].astype(cdt), whi_ref[...],
                              preferred_element_type=jnp.float32)
    preact = preact + jnp.dot(h_iprev_j_ref[...].astype(cdt), whj_ref[...],
                              preferred_element_type=jnp.float32)
    preact = preact + b_ref[...]

    # sigmoid(x) == 0.5*tanh(0.5*x) + 0.5 : one EUP op per element instead of
    # exp + divide.  With H a multiple of 128 every slice below is whole
    # 128-lane tiles, so the gate math is pure VPU/EUP elementwise.
    gates = 0.5 * jnp.tanh(0.5 * preact[:, : 4 * H]) + 0.5   # [bb, 4H]
    g_t = jnp.tanh(preact[:, 4 * H:])                        # [bb, H]

    i_t = gates[:, 0 * H:1 * H]
    fl_t = gates[:, 1 * H:2 * H]
    fr_t = gates[:, 2 * H:3 * H]
    o_t = gates[:, 3 * H:4 * H]

    c_ij = c_iprev_j_ref[...] * fl_t + c_ijprev_ref[...] * fr_t + i_t * g_t
    h_ij = jnp.tanh(o_t * c_ij)

    # Two separate lane-dense outputs (unmasked vst for H a multiple of 128).
    h_out_ref[...] = h_ij.astype(h_out_ref.dtype)
    c_out_ref[...] = c_ij.astype(c_out_ref.dtype)


def prepare_lstm_attention_params(params, *, compute_dtype=jnp.float32):
    """One-time parameter packing (hoisted out of the per-cell hot path).

    params: PyTorch-layout (W_i2h [5H,D], b_i2h [5H], W_h2h_j [5H,H],
            b_h2h_j [5H], W_h2h_i [5H,H], b_h2h_i [5H]).
    Returns (wx [D,5H], whi [H,5H], whj [H,5H], b [1,5H]).
    compute_dtype=jnp.bfloat16 recommended on v5e/v6e/v7x (f32 accumulate kept;
    bias / cell state / gate math stay f32 either way).
    """
    W_i2h, b_i2h, W_h2h_j, b_h2h_j, W_h2h_i, b_h2h_i = params
    wx = W_i2h.T.astype(compute_dtype)     # pairs with x
    whi = W_h2h_i.T.astype(compute_dtype)  # pairs with h_ijprev
    whj = W_h2h_j.T.astype(compute_dtype)  # pairs with h_iprev_j
    b = (b_i2h + b_h2h_i + b_h2h_j).reshape(1, -1).astype(jnp.float32)
    return wx, whi, whj, b


def lstm_attention_forward(x, hidden, prepared, *, block_b=256,
                           vmem_limit_bytes=None):
    """Run one LSTM_Attention cell with a single pallas_call.

    x: [B, input_size]; hidden: (h_iprev_j, h_ijprev, c_iprev_j, c_ijprev),
    each [B, H]; prepared: output of prepare_lstm_attention_params.
    Returns (h_ij, c_ij), each [B, H] float32.
    """
    wx, whi, whj, b = prepared
    h_iprev_j, h_ijprev, c_iprev_j, c_ijprev = hidden
    B, H = h_iprev_j.shape
    D = x.shape[-1]
    N = 5 * H

    # Batch tiling: one block if small, otherwise block_b-row tiles.  The grid
    # uses cdiv so a non-divisible B is handled by Pallas block masking (no
    # wrapper-side jnp.pad).  256-row tiles fill the v6e/v7x MXU M dimension;
    # on v7x >=2 tiles lets the 'parallel' axis shard across both TensorCores.
    bb = B if B <= block_b else block_b
    grid = (pl.cdiv(B, bb),)

    cp_kwargs = dict(dimension_semantics=("parallel",))
    if vmem_limit_bytes is not None:
        cp_kwargs["vmem_limit_bytes"] = vmem_limit_bytes

    h_ij, c_ij = pl.pallas_call(
        _lstm_attention_kernel,
        out_shape=(jax.ShapeDtypeStruct((B, H), jnp.float32),
                   jax.ShapeDtypeStruct((B, H), jnp.float32)),
        grid=grid,
        in_specs=[
            pl.BlockSpec((bb, D), lambda i: (i, 0)),   # x
            pl.BlockSpec((bb, H), lambda i: (i, 0)),   # h_ijprev
            pl.BlockSpec((bb, H), lambda i: (i, 0)),   # h_iprev_j
            pl.BlockSpec((bb, H), lambda i: (i, 0)),   # c_iprev_j
            pl.BlockSpec((bb, H), lambda i: (i, 0)),   # c_ijprev
            pl.BlockSpec((D, N), lambda i: (0, 0)),    # wx  : VMEM-resident
            pl.BlockSpec((H, N), lambda i: (0, 0)),    # whi : VMEM-resident
            pl.BlockSpec((H, N), lambda i: (0, 0)),    # whj : VMEM-resident
            pl.BlockSpec((1, N), lambda i: (0, 0)),    # bias: VMEM-resident
        ],
        out_specs=(
            pl.BlockSpec((bb, H), lambda i: (i, 0)),   # h_ij
            pl.BlockSpec((bb, H), lambda i: (i, 0)),   # c_ij
        ),
        compiler_params=pltpu.CompilerParams(**cp_kwargs),
    )(x, h_ijprev, h_iprev_j, c_iprev_j, c_ijprev, wx, whi, whj, b)
    return h_ij, c_ij


def _reference_forward(x, hidden, params):
    """Pure-JAX reference mirroring the PyTorch op order."""
    h_iprev_j, h_ijprev, c_iprev_j, c_ijprev = hidden
    W_i2h, b_i2h, W_h2h_j, b_h2h_j, W_h2h_i, b_h2h_i = params
    H = h_iprev_j.shape[-1]
    preact = (x @ W_i2h.T + b_i2h) + (h_ijprev @ W_h2h_i.T + b_h2h_i) \
             + (h_iprev_j @ W_h2h_j.T + b_h2h_j)
    gates = jax.nn.sigmoid(preact[:, : 4 * H])
    g_t = jnp.tanh(preact[:, 4 * H:])
    i_t = gates[:, :H]
    fl_t = gates[:, H:2 * H]
    fr_t = gates[:, 2 * H:3 * H]
    o_t = gates[:, -H:]
    c_ij = c_iprev_j * fl_t + c_ijprev * fr_t + i_t * g_t
    h_ij = jnp.tanh(o_t * c_ij)
    return h_ij, c_ij


if __name__ == "__main__":
    # Small but TPU-friendly shapes: H=128 (one full lane tile per gate),
    # B=8 (fills the 8 sublanes), D=32.  Real workloads should batch many
    # cells/sequences so each tile has >=256 rows (>=128 on v5e).
    B, D_IN, H = 8, 32, 128

    key = jax.random.PRNGKey(0)
    ks = jax.random.split(key, 11)
    std = 1.0 / math.sqrt(H)

    def uni(k, shape):
        return jax.random.uniform(k, shape, jnp.float32, minval=-std, maxval=std)

    # Parameter init matches reset_parameters: U(-1/sqrt(H), 1/sqrt(H)).
    W_i2h = uni(ks[0], (5 * H, D_IN))
    b_i2h = uni(ks[1], (5 * H,))
    W_h2h_j = uni(ks[2], (5 * H, H))
    b_h2h_j = uni(ks[3], (5 * H,))
    W_h2h_i = uni(ks[4], (5 * H, H))
    b_h2h_i = uni(ks[5], (5 * H,))
    params = (W_i2h, b_i2h, W_h2h_j, b_h2h_j, W_h2h_i, b_h2h_i)

    x = jax.random.normal(ks[6], (B, D_IN), jnp.float32)
    h_iprev_j = jax.random.normal(ks[7], (B, H), jnp.float32)
    h_ijprev = jax.random.normal(ks[8], (B, H), jnp.float32)
    c_iprev_j = jax.random.normal(ks[9], (B, H), jnp.float32)
    c_ijprev = jax.random.normal(ks[10], (B, H), jnp.float32)
    hidden = (h_iprev_j, h_ijprev, c_iprev_j, c_ijprev)

    h_ref, c_ref = _reference_forward(x, hidden, params)

    # --- f32 path (strict correctness check) -------------------------------
    prepared_f32 = prepare_lstm_attention_params(params)  # one-time packing
    h_ij, c_ij = lstm_attention_forward(x, hidden, prepared_f32)
    (h_ij, c_ij) = jax.block_until_ready((h_ij, c_ij))
    assert h_ij.shape == (B, H) and c_ij.shape == (B, H)
    assert jnp.allclose(h_ij, h_ref, atol=1e-4, rtol=1e-4)
    assert jnp.allclose(c_ij, c_ref, atol=1e-4, rtol=1e-4)

    # --- bf16-operand path (half the weight DMA, 2x MXU rate; f32 accumulate)
    prepared_bf16 = prepare_lstm_attention_params(
        params, compute_dtype=jnp.bfloat16)
    h_bf, c_bf = lstm_attention_forward(x, hidden, prepared_bf16)
    (h_bf, c_bf) = jax.block_until_ready((h_bf, c_bf))
    assert jnp.allclose(h_bf, h_ref, atol=5e-2, rtol=5e-2)
    assert jnp.allclose(c_bf, c_ref, atol=5e-2, rtol=5e-2)

    print("KERNEL_OK")
</pallas_src>

<mosaic_0001>
module attributes {stable_mosaic.version = 11 : i64} {
  func.func @_lstm_attention_kernel(%arg0: i32, %arg1: memref<8x32xf32, #tpu.memory_space<vmem>>, %arg2: memref<8x128xf32, #tpu.memory_space<vmem>>, %arg3: memref<8x128xf32, #tpu.memory_space<vmem>>, %arg4: memref<8x128xf32, #tpu.memory_space<vmem>>, %arg5: memref<8x128xf32, #tpu.memory_space<vmem>>, %arg6: memref<32x640xf32, #tpu.memory_space<vmem>>, %arg7: memref<128x640xf32, #tpu.memory_space<vmem>>, %arg8: memref<128x640xf32, #tpu.memory_space<vmem>>, %arg9: memref<1x640xf32, #tpu.memory_space<vmem>>, %arg10: memref<8x128xf32, #tpu.memory_space<vmem>>, %arg11: memref<8x128xf32, #tpu.memory_space<vmem>>) attributes {dimension_semantics = [#tpu.dimension_semantics<parallel>], iteration_bounds = array<i64: 1>, scalar_prefetch = 0 : i64, scratch_operands = 0 : i64, tpu.core_type = #tpu.core_type<tc>, window_params = [{transform_indices = @transform_0, window_bounds = array<i64: 8, 32>}, {transform_indices = @transform_1, window_bounds = array<i64: 8, 128>}, {transform_indices = @transform_2, window_bounds = array<i64: 8, 128>}, {transform_indices = @transform_3, window_bounds = array<i64: 8, 128>}, {transform_indices = @transform_4, window_bounds = array<i64: 8, 128>}, {pipeline_mode = #tpu.pipeline_mode<synchronous>, transform_indices = @transform_5, window_bounds = array<i64: 32, 640>}, {pipeline_mode = #tpu.pipeline_mode<synchronous>, transform_indices = @transform_6, window_bounds = array<i64: 128, 640>}, {pipeline_mode = #tpu.pipeline_mode<synchronous>, transform_indices = @transform_7, window_bounds = array<i64: 128, 640>}, {pipeline_mode = #tpu.pipeline_mode<synchronous>, transform_indices = @transform_8, window_bounds = array<i64: 1, 640>}, {transform_indices = @transform_9, window_bounds = array<i64: 8, 128>}, {transform_indices = @transform_10, window_bounds = array<i64: 8, 128>}]} {
    %c0 = arith.constant 0 : index
    %c0_0 = arith.constant 0 : index
    %0 = vector.load %arg1[%c0, %c0_0] : memref<8x32xf32, #tpu.memory_space<vmem>>, vector<8x32xf32>
    %c0_1 = arith.constant 0 : index
    %c0_2 = arith.constant 0 : index
    %1 = vector.load %arg6[%c0_1, %c0_2] : memref<32x640xf32, #tpu.memory_space<vmem>>, vector<32x640xf32>
    %cst = arith.constant dense<0.000000e+00> : vector<8x640xf32>
    %2 = tpu.matmul %0, %1, %cst {dimension_numbers = #tpu.dot_dimension_numbers<[1], [0], [0], [1], [0, 0, 1, 1], [], []>} : vector<8x32xf32>, vector<32x640xf32>, vector<8x640xf32> -> vector<8x640xf32>
    %c0_3 = arith.constant 0 : index
    %c0_4 = arith.constant 0 : index
    %3 = vector.load %arg2[%c0_3, %c0_4] : memref<8x128xf32, #tpu.memory_space<vmem>>, vector<8x128xf32>
    %c0_5 = arith.constant 0 : index
    %c0_6 = arith.constant 0 : index
    %4 = vector.load %arg7[%c0_5, %c0_6] : memref<128x640xf32, #tpu.memory_space<vmem>>, vector<128x640xf32>
    %cst_7 = arith.constant dense<0.000000e+00> : vector<8x640xf32>
    %5 = tpu.matmul %3, %4, %cst_7 {dimension_numbers = #tpu.dot_dimension_numbers<[1], [0], [0], [1], [0, 0, 1, 1], [], []>} : vector<8x128xf32>, vector<128x640xf32>, vector<8x640xf32> -> vector<8x640xf32>
    %6 = arith.addf %2, %5 : vector<8x640xf32>
    %c0_8 = arith.constant 0 : index
    %c0_9 = arith.constant 0 : index
    %7 = vector.load %arg3[%c0_8, %c0_9] : memref<8x128xf32, #tpu.memory_space<vmem>>, vector<8x128xf32>
    %c0_10 = arith.constant 0 : index
    %c0_11 = arith.constant 0 : index
    %8 = vector.load %arg8[%c0_10, %c0_11] : memref<128x640xf32, #tpu.memory_space<vmem>>, vector<128x640xf32>
    %cst_12 = arith.constant dense<0.000000e+00> : vector<8x640xf32>
    %9 = tpu.matmul %7, %8, %cst_12 {dimension_numbers = #tpu.dot_dimension_numbers<[1], [0], [0], [1], [0, 0, 1, 1], [], []>} : vector<8x128xf32>, vector<128x640xf32>, vector<8x640xf32> -> vector<8x640xf32>
    %10 = arith.addf %6, %9 : vector<8x640xf32>
    %c0_13 = arith.constant 0 : index
    %c0_14 = arith.constant 0 : index
    %11 = vector.load %arg9[%c0_13, %c0_14] : memref<1x640xf32, #tpu.memory_space<vmem>>, vector<1x640xf32>
    %12 = vector.broadcast %11 : vector<1x640xf32> to vector<8x640xf32>
    %13 = arith.addf %10, %12 : vector<8x640xf32>
    %14 = vector.extract_strided_slice %13 {offsets = [0, 0], sizes = [8, 512], strides = [1, 1]} : vector<8x640xf32> to vector<8x512xf32>
    %cst_15 = arith.constant 5.000000e-01 : f32
    %15 = vector.broadcast %cst_15 : f32 to vector<8x512xf32>
    %16 = arith.mulf %15, %14 : vector<8x512xf32>
    %17 = math.tanh %16 : vector<8x512xf32>
    %cst_16 = arith.constant 5.000000e-01 : f32
    %18 = vector.broadcast %cst_16 : f32 to vector<8x512xf32>
    %19 = arith.mulf %18, %17 : vector<8x512xf32>
    %cst_17 = arith.constant 5.000000e-01 : f32
    %20 = vector.broadcast %cst_17 : f32 to vector<8x512xf32>
    %21 = arith.addf %19, %20 : vector<8x512xf32>
    %22 = vector.extract_strided_slice %13 {offsets = [0, 512], sizes = [8, 128], strides = [1, 1]} : vector<8x640xf32> to vector<8x128xf32>
    %23 = math.tanh %22 : vector<8x128xf32>
    %24 = vector.extract_strided_slice %21 {offsets = [0, 0], sizes = [8, 128], strides = [1, 1]} : vector<8x512xf32> to vector<8x128xf32>
    %25 = vector.extract_strided_slice %21 {offsets = [0, 128], sizes = [8, 128], strides = [1, 1]} : vector<8x512xf32> to vector<8x128xf32>
    %26 = vector.extract_strided_slice %21 {offsets = [0, 256], sizes = [8, 128], strides = [1, 1]} : vector<8x512xf32> to vector<8x128xf32>
    %27 = vector.extract_strided_slice %21 {offsets = [0, 384], sizes = [8, 128], strides = [1, 1]} : vector<8x512xf32> to vector<8x128xf32>
    %c0_18 = arith.constant 0 : index
    %c0_19 = arith.constant 0 : index
    %28 = vector.load %arg4[%c0_18, %c0_19] : memref<8x128xf32, #tpu.memory_space<vmem>>, vector<8x128xf32>
    %29 = arith.mulf %28, %25 : vector<8x128xf32>
    %c0_20 = arith.constant 0 : index
    %c0_21 = arith.constant 0 : index
    %30 = vector.load %arg5[%c0_20, %c0_21] : memref<8x128xf32, #tpu.memory_space<vmem>>, vector<8x128xf32>
    %31 = arith.mulf %30, %26 : vector<8x128xf32>
    %32 = arith.addf %29, %31 : vector<8x128xf32>
    %33 = arith.mulf %24, %23 : vector<8x128xf32>
    %34 = arith.addf %32, %33 : vector<8x128xf32>
    %35 = arith.mulf %27, %34 : vector<8x128xf32>
    %36 = math.tanh %35 : vector<8x128xf32>
    %c0_22 = arith.constant 0 : index
    %c0_23 = arith.constant 0 : index
    %37 = vector.load %arg10[%c0_22, %c0_23] : memref<8x128xf32, #tpu.memory_space<vmem>>, vector<8x128xf32>
    tpu.vector_store %arg10[%c0_22, %c0_23], %36 {strides = array<i32>} : memref<8x128xf32, #tpu.memory_space<vmem>>, vector<8x128xf32>,
    %c0_24 = arith.constant 0 : index
    %c0_25 = arith.constant 0 : index
    %38 = vector.load %arg11[%c0_24, %c0_25] : memref<8x128xf32, #tpu.memory_space<vmem>>, vector<8x128xf32>
    tpu.vector_store %arg11[%c0_24, %c0_25], %34 {strides = array<i32>} : memref<8x128xf32, #tpu.memory_space<vmem>>, vector<8x128xf32>,
    return
  }
  func.func @transform_0(%arg0: i32) -> (i32, i32) {
    %c0_i32 = arith.constant 0 : i32
    %c0_i32_0 = arith.constant 0 : i32
    return %arg0, %c0_i32 : i32, i32
  }
  func.func @transform_1(%arg0: i32) -> (i32, i32) {
    %c0_i32 = arith.constant 0 : i32
    %c0_i32_0 = arith.constant 0 : i32
    return %arg0, %c0_i32 : i32, i32
  }
  func.func @transform_2(%arg0: i32) -> (i32, i32) {
    %c0_i32 = arith.constant 0 : i32
    %c0_i32_0 = arith.constant 0 : i32
    return %arg0, %c0_i32 : i32, i32
  }
  func.func @transform_3(%arg0: i32) -> (i32, i32) {
    %c0_i32 = arith.constant 0 : i32
    %c0_i32_0 = arith.constant 0 : i32
    return %arg0, %c0_i32 : i32, i32
  }
  func.func @transform_4(%arg0: i32) -> (i32, i32) {
    %c0_i32 = arith.constant 0 : i32
    %c0_i32_0 = arith.constant 0 : i32
    return %arg0, %c0_i32 : i32, i32
  }
  func.func @transform_5(%arg0: i32) -> (i32, i32) {
    %c0_i32 = arith.constant 0 : i32
    %c0_i32_0 = arith.constant 0 : i32
    %c0_i32_1 = arith.constant 0 : i32
    return %c0_i32, %c0_i32_0 : i32, i32
  }
  func.func @transform_6(%arg0: i32) -> (i32, i32) {
    %c0_i32 = arith.constant 0 : i32
    %c0_i32_0 = arith.constant 0 : i32
    %c0_i32_1 = arith.constant 0 : i32
    return %c0_i32, %c0_i32_0 : i32, i32
  }
  func.func @transform_7(%arg0: i32) -> (i32, i32) {
    %c0_i32 = arith.constant 0 : i32
    %c0_i32_0 = arith.constant 0 : i32
    %c0_i32_1 = arith.constant 0 : i32
    return %c0_i32, %c0_i32_0 : i32, i32
  }
  func.func @transform_8(%arg0: i32) -> (i32, i32) {
    %c0_i32 = arith.constant 0 : i32
    %c0_i32_0 = arith.constant 0 : i32
    %c0_i32_1 = arith.constant 0 : i32
    return %c0_i32, %c0_i32_0 : i32, i32
  }
  func.func @transform_9(%arg0: i32) -> (i32, i32) {
    %c0_i32 = arith.constant 0 : i32
    %c0_i32_0 = arith.constant 0 : i32
    return %arg0, %c0_i32 : i32, i32
  }
  func.func @transform_10(%arg0: i32) -> (i32, i32) {
    %c0_i32 = arith.constant 0 : i32
    %c0_i32_0 = arith.constant 0 : i32
    return %arg0, %c0_i32 : i32, i32
  }
}

</mosaic_0001>

<llo_original>
// kernel: tpu_custom_call.1
$region0: #{tpu_custom_call.1}
  #allocation0 [shape = 'u32[]', space=smem, size = 0x4, offset = 0x4, fixed_abs, tag = 'smem constant byte address 0x4 - core index']
  #allocation1 [shape = 'u32[72,128]{1,0:T(1,128)}', space=vmem, size = 0x9000, scoped, tag = 'internal scratch']
  %s0 = inlined_call_operand.hbm [shape: f32[8,32], index: 0, kind: input, shape index: {}]
  %s1 = inlined_call_operand.hbm [shape: f32[8,128], index: 1, kind: input, shape index: {}]
  %s2 = inlined_call_operand.hbm [shape: f32[8,128], index: 2, kind: input, shape index: {}]
  %s3 = inlined_call_operand.hbm [shape: f32[8,128], index: 3, kind: input, shape index: {}]
  %s4 = inlined_call_operand.hbm [shape: f32[8,128], index: 4, kind: input, shape index: {}]
  %s5 = inlined_call_operand.hbm [shape: f32[32,640], index: 5, kind: input, shape index: {}]
  %s6 = inlined_call_operand.hbm [shape: f32[128,640], index: 6, kind: input, shape index: {}]
  %s7 = inlined_call_operand.hbm [shape: f32[128,640], index: 7, kind: input, shape index: {}]
  %s8 = inlined_call_operand.vmem [shape: f32[1,640], index: 8, kind: input, shape index: {}]
  %s9 = inlined_call_operand.hbm [shape: f32[8,128], index: 9, kind: output, shape index: {0}]
  %s10 = inlined_call_operand.hbm [shape: f32[8,128], index: 10, kind: output, shape index: {1}]
  %11 = xla_tuple %s9, %s10
  %s12 = sld [smem:[#allocation0]]
  $region86: #{tpu_custom_call.1} parent=0
    _
  %s14 = ssub.s32 1, %s12
  %s15 = scalar_select 0, %s14, %s12
  $region1: #{tpu_custom_call.1} parent=0
    #allocation2 [shape = 'u8[4096]{0}', space=vmem, size = 0x1000, scoped, tag = 'input window, operand 0, single buffered']
    #allocation3 [shape = 's32[1]{0}', space=sflag, size = 0x4, scoped, tag = 'scoped memory for tpu_custom_call.1']
    #allocation4 [shape = 's32[1]{0}', space=sflag, size = 0x4, scoped, tag = 'scoped memory for tpu_custom_call.1']
    #allocation5 [shape = 'u8[4096]{0}', space=vmem, size = 0x1000, scoped, tag = 'input window, operand 1, single buffered']
    #allocation6 [shape = 's32[1]{0}', space=sflag, size = 0x4, scoped, tag = 'scoped memory for tpu_custom_call.1']
    #allocation7 [shape = 'u8[4096]{0}', space=vmem, size = 0x1000, scoped, tag = 'input window, operand 2, single buffered']
    #allocation8 [shape = 'u8[4096]{0}', space=vmem, size = 0x1000, scoped, tag = 'input window, operand 3, single buffered']
    #allocation9 [shape = 's32[1]{0}', space=sflag, size = 0x4, scoped, tag = 'scoped memory for tpu_custom_call.1']
    #allocation10 [shape = 'u8[4096]{0}', space=vmem, size = 0x1000, scoped, tag = 'input window, operand 4, single buffered']
    #allocation11 [shape = 'u8[81920]{0}', space=vmem, size = 0x14000, scoped, tag = 'input window, operand 5, single buffered']
    #allocation12 [shape = 's32[1]{0}', space=sflag, size = 0x4, scoped, tag = 'scoped memory for tpu_custom_call.1']
    #allocation13 [shape = 'u8[327680]{0}', space=vmem, size = 0x50000, scoped, tag = 'input window, operand 6, single buffered']
    #allocation14 [shape = 'u8[327680]{0}', space=vmem, size = 0x50000, scoped, tag = 'input window, operand 7, single buffered']
    #allocation15 [shape = 's32[1]{0}', space=sflag, size = 0x4, scoped, tag = 'scoped memory for tpu_custom_call.1']
    #allocation16 [shape = 'u8[4096]{0}', space=vmem, size = 0x1000, scoped, tag = 'output window, operand 0, single buffered']
    #allocation17 [shape = 'u8[4096]{0}', space=vmem, size = 0x1000, scoped, tag = 'output window, operand 1, single buffered']
    #allocation18 [shape = 's32[1]{0}', space=sflag, size = 0x4, scoped, tag = 'scoped memory for tpu_custom_call.1']
    %16 = vsyncpa [#allocation3], 0
    %17 = vsyncpa [#allocation6], 0
    %18 = vsyncpa [#allocation9], 0
    %19 = vsyncpa [#allocation12], 0
    %20 = vsyncpa [#allocation15], 0
    %21 = vsyncpa [#allocation4], 0
    %22 = vsyncpa [#allocation18], 0
    // Predicated region
    $region2: #{tpu_custom_call.1} parent=1 // pred_check
      _
    $region3: #{tpu_custom_call.1} parent=1 // pred_check_branch
      %24 = sbr.rel (0) target = $region5
    $region4: #{tpu_custom_call.1} parent=1 // pred_region
      %26 = vsyncadd [#allocation3], 0
      %s28 = sshll.u32 %s0, 4
      %s29 = int_to_ptr.hbm [resolvable:$true] %s28
      %s30 = sshll.u32 [#allocation2], 4
      %s31 = int_to_ptr.vmem [resolvable:$true] %s30
      %33 = dma.hbm_to_vmem [thread:$0]  %s29, 128, %s31, [#allocation3]
    $region5: #{tpu_custom_call.1} parent=1 // pred_fallthru
      _
    // Predicated region
    $region6: #{tpu_custom_call.1} parent=1 // pred_check
      _
    $region7: #{tpu_custom_call.1} parent=1 // pred_check_branch
      %35 = sbr.rel (0) target = $region9
    $region8: #{tpu_custom_call.1} parent=1 // pred_region
      %37 = vsyncadd [#allocation6], 0
      %s39 = sshll.u32 %s1, 4
      %s40 = int_to_ptr.hbm [resolvable:$true] %s39
      %s41 = sshll.u32 [#allocation5], 4
      %s42 = int_to_ptr.vmem [resolvable:$true] %s41
      %44 = dma.hbm_to_vmem [thread:$0]  %s40, 128, %s42, [#allocation6]
    $region9: #{tpu_custom_call.1} parent=1 // pred_fallthru
      _
    // Predicated region
    $region10: #{tpu_custom_call.1} parent=1 // pred_check
      _
    $region11: #{tpu_custom_call.1} parent=1 // pred_check_branch
      %46 = sbr.rel (0) target = $region13
    $region12: #{tpu_custom_call.1} parent=1 // pred_region
      %48 = vsyncadd [#allocation6], 0
      %s50 = sshll.u32 %s2, 4
      %s51 = int_to_ptr.hbm [resolvable:$true] %s50
      %s52 = sshll.u32 [#allocation7], 4
      %s53 = int_to_ptr.vmem [resolvable:$true] %s52
      %55 = dma.hbm_to_vmem [thread:$0]  %s51, 128, %s53, [#allocation6]
    $region13: #{tpu_custom_call.1} parent=1 // pred_fallthru
      _
    // Predicated region
    $region14: #{tpu_custom_call.1} parent=1 // pred_check
      _
    $region15: #{tpu_custom_call.1} parent=1 // pred_check_branch
      %57 = sbr.rel (0) target = $region17
    $region16: #{tpu_custom_call.1} parent=1 // pred_region
      %59 = vsyncadd [#allocation9], 0
      %s61 = sshll.u32 %s3, 4
      %s62 = int_to_ptr.hbm [resolvable:$true] %s61
      %s63 = sshll.u32 [#allocation8], 4
      %s64 = int_to_ptr.vmem [resolvable:$true] %s63
      %66 = dma.hbm_to_vmem [thread:$0]  %s62, 128, %s64, [#allocation9]
    $region17: #{tpu_custom_call.1} parent=1 // pred_fallthru
      _
    // Predicated region
    $region18: #{tpu_custom_call.1} parent=1 // pred_check
      _
    $region19: #{tpu_custom_call.1} parent=1 // pred_check_branch
      %68 = sbr.rel (0) target = $region21
    $region20: #{tpu_custom_call.1} parent=1 // pred_region
      %70 = vsyncadd [#allocation9], 0
      %s72 = sshll.u32 %s4, 4
      %s73 = int_to_ptr.hbm [resolvable:$true] %s72
      %s74 = sshll.u32 [#allocation10], 4
      %s75 = int_to_ptr.vmem [resolvable:$true] %s74
      %77 = dma.hbm_to_vmem [thread:$0]  %s73, 128, %s75, [#allocation9]
    $region21: #{tpu_custom_call.1} parent=1 // pred_fallthru
      _
    // Predicated region
    $region22: #{tpu_custom_call.1} parent=1 // pred_check
      _
    $region23: #{tpu_custom_call.1} parent=1 // pred_check_branch
      %79 = sbr.rel (0) target = $region25
    $region24: #{tpu_custom_call.1} parent=1 // pred_region
      %81 = vsyncadd [#allocation12], 0
      %s82 = sshll.u32 %s5, 4
      %s83 = int_to_ptr.hbm [resolvable:$true] %s82
      %s84 = sshll.u32 [#allocation11], 4
      %s85 = int_to_ptr.vmem [resolvable:$true] %s84
      %90 = dma.hbm_to_vmem [thread:$0]  %s83, 2560, %s85, [#allocation12], 640, 640, 40
    $region25: #{tpu_custom_call.1} parent=1 // pred_fallthru
      _
    // Predicated region
    $region26: #{tpu_custom_call.1} parent=1 // pred_check
      _
    $region27: #{tpu_custom_call.1} parent=1 // pred_check_branch
      %92 = sbr.rel (0) target = $region29
    $region28: #{tpu_custom_call.1} parent=1 // pred_region
      %94 = vsyncadd [#allocation12], 0
      %s95 = sshll.u32 %s6, 4
      %s96 = int_to_ptr.hbm [resolvable:$true] %s95
      %s97 = sshll.u32 [#allocation13], 4
      %s98 = int_to_ptr.vmem [resolvable:$true] %s97
      %103 = dma.hbm_to_vmem [thread:$0]  %s96, 10240, %s98, [#allocation12], 640, 640, 40
    $region29: #{tpu_custom_call.1} parent=1 // pred_fallthru
      _
    // Predicated region
    $region30: #{tpu_custom_call.1} parent=1 // pred_check
      _
    $region31: #{tpu_custom_call.1} parent=1 // pred_check_branch
      %105 = sbr.rel (0) target = $region33
    $region32: #{tpu_custom_call.1} parent=1 // pred_region
      %107 = vsyncadd [#allocation15], 0
      %s108 = sshll.u32 %s7, 4
      %s109 = int_to_ptr.hbm [resolvable:$true] %s108
      %s110 = sshll.u32 [#allocation14], 4
      %s111 = int_to_ptr.vmem [resolvable:$true] %s110
      %116 = dma.hbm_to_vmem [thread:$0]  %s109, 10240, %s111, [#allocation15], 640, 640, 40
    $region33: #{tpu_custom_call.1} parent=1 // pred_fallthru
      _
    // Predicated region
    $region34: #{tpu_custom_call.1} parent=1 // pred_check
      _
    $region35: #{tpu_custom_call.1} parent=1 // pred_check_branch
      %118 = sbr.rel (0) target = $region37
    $region36: #{tpu_custom_call.1} parent=1 // pred_region
      _
    $region37: #{tpu_custom_call.1} parent=1 // pred_fallthru
      _
    // Predicated region
    $region38: #{tpu_custom_call.1} parent=1 // pred_check
      _
    $region39: #{tpu_custom_call.1} parent=1 // pred_check_branch
      %120 = sbr.rel (0) target = $region41
    $region40: #{tpu_custom_call.1} parent=1 // pred_region
      %122 = dma.done [#allocation3], 128
    $region41: #{tpu_custom_call.1} parent=1 // pred_fallthru
      _
    // Predicated region
    $region42: #{tpu_custom_call.1} parent=1 // pred_check
      _
    $region43: #{tpu_custom_call.1} parent=1 // pred_check_branch
      %124 = sbr.rel (0) target = $region45
    $region44: #{tpu_custom_call.1} parent=1 // pred_region
      %126 = dma.done [#allocation6], 128
    $region45: #{tpu_custom_call.1} parent=1 // pred_fallthru
      _
    // Predicated region
    $region46: #{tpu_custom_call.1} parent=1 // pred_check
      _
    $region47: #{tpu_custom_call.1} parent=1 // pred_check_branch
      %128 = sbr.rel (0) target = $region49
    $region48: #{tpu_custom_call.1} parent=1 // pred_region
      %130 = dma.done [#allocation6], 128
    $region49: #{tpu_custom_call.1} parent=1 // pred_fallthru
      _
    // Predicated region
    $region50: #{tpu_custom_call.1} parent=1 // pred_check
      _
    $region51: #{tpu_custom_call.1} parent=1 // pred_check_branch
      %132 = sbr.rel (0) target = $region53
    $region52: #{tpu_custom_call.1} parent=1 // pred_region
      %134 = dma.done [#allocation9], 128
    $region53: #{tpu_custom_call.1} parent=1 // pred_fallthru
      _
    // Predicated region
    $region54: #{tpu_custom_call.1} parent=1 // pred_check
      _
    $region55: #{tpu_custom_call.1} parent=1 // pred_check_branch
      %136 = sbr.rel (0) target = $region57
    $region56: #{tpu_custom_call.1} parent=1 // pred_region
      %138 = dma.done [#allocation9], 128
    $region57: #{tpu_custom_call.1} parent=1 // pred_fallthru
      _
    // Predicated region
    $region58: #{tpu_custom_call.1} parent=1 // pred_check
      _
    $region59: #{tpu_custom_call.1} parent=1 // pred_check_branch
      %140 = sbr.rel (0) target = $region61
    $region60: #{tpu_custom_call.1} parent=1 // pred_region
      %142 = dma.done [#allocation12], 2560
    $region61: #{tpu_custom_call.1} parent=1 // pred_fallthru
      _
    // Predicated region
    $region62: #{tpu_custom_call.1} parent=1 // pred_check
      _
    $region63: #{tpu_custom_call.1} parent=1 // pred_check_branch
      %144 = sbr.rel (0) target = $region65
    $region64: #{tpu_custom_call.1} parent=1 // pred_region
      %146 = dma.done [#allocation12], 10240
    $region65: #{tpu_custom_call.1} parent=1 // pred_fallthru
      _
    // Predicated region
    $region66: #{tpu_custom_call.1} parent=1 // pred_check
      _
    $region67: #{tpu_custom_call.1} parent=1 // pred_check_branch
      %148 = sbr.rel (0) target = $region69
    $region68: #{tpu_custom_call.1} parent=1 // pred_region
      %150 = dma.done [#allocation15], 10240
    $region69: #{tpu_custom_call.1} parent=1 // pred_fallthru
      _
    %v151 = vld [vmem:[#allocation2] sm:$0xff]
    %v152 = vld [vmem:[#allocation11] sm:$0xff]
    %v153 = vld [vmem:[#allocation11 + $0x8] sm:$0xff]
    %v154 = vld [vmem:[#allocation11 + $0x10] sm:$0xff]
    %v155 = vld [vmem:[#allocation11 + $0x18] sm:$0xff]
    %v156 = vld [vmem:[#allocation11 + $0x20] sm:$0xff]
    %v157 = vld [vmem:[#allocation11 + $0x28] sm:$0xff]
    %v158 = vld [vmem:[#allocation11 + $0x30] sm:$0xff]
    %v159 = vld [vmem:[#allocation11 + $0x38] sm:$0xff]
    %v160 = vld [vmem:[#allocation11 + $0x40] sm:$0xff]
    %v161 = vld [vmem:[#allocation11 + $0x48] sm:$0xff]
    %v162 = vld [vmem:[#allocation11 + $0x50] sm:$0xff]
    %v163 = vld [vmem:[#allocation11 + $0x58] sm:$0xff]
    %v164 = vld [vmem:[#allocation11 + $0x60] sm:$0xff]
    %v165 = vld [vmem:[#allocation11 + $0x68] sm:$0xff]
    %v166 = vld [vmem:[#allocation11 + $0x70] sm:$0xff]
    %v167 = vld [vmem:[#allocation11 + $0x78] sm:$0xff]
    %v168 = vld [vmem:[#allocation11 + $0x80] sm:$0xff]
    %v169 = vld [vmem:[#allocation11 + $0x88] sm:$0xff]
    %v170 = vld [vmem:[#allocation11 + $0x90] sm:$0xff]
    %v171 = vld [vmem:[#allocation11 + $0x98] sm:$0xff]
    %v172 = vld [vmem:[#allocation5] sm:$0xff]
    %v173 = vld [vmem:[#allocation13] sm:$0xff]
    %v174 = vld [vmem:[#allocation13 + $0x8] sm:$0xff]
    %v175 = vld [vmem:[#allocation13 + $0x10] sm:$0xff]
    %v176 = vld [vmem:[#allocation13 + $0x18] sm:$0xff]
    %v177 = vld [vmem:[#allocation13 + $0x20] sm:$0xff]
    %v178 = vld [vmem:[#allocation13 + $0x28] sm:$0xff]
    %v179 = vld [vmem:[#allocation13 + $0x30] sm:$0xff]
    %v180 = vld [vmem:[#allocation13 + $0x38] sm:$0xff]
    %v181 = vld [vmem:[#allocation13 + $0x40] sm:$0xff]
    %v182 = vld [vmem:[#allocation13 + $0x48] sm:$0xff]
    %v183 = vld [vmem:[#allocation13 + $0x50] sm:$0xff]
    %v184 = vld [vmem:[#allocation13 + $0x58] sm:$0xff]
    %v185 = vld [vmem:[#allocation13 + $0x60] sm:$0xff]
    %v186 = vld [vmem:[#allocation13 + $0x68] sm:$0xff]
    %v187 = vld [vmem:[#allocation13 + $0x70] sm:$0xff]
    %v188 = vld [vmem:[#allocation13 + $0x78] sm:$0xff]
    %v189 = vld [vmem:[#allocation13 + $0x80] sm:$0xff]
    %v190 = vld [vmem:[#allocation13 + $0x88] sm:$0xff]
    %v191 = vld [vmem:[#allocation13 + $0x90] sm:$0xff]
    %v192 = vld [vmem:[#allocation13 + $0x98] sm:$0xff]
    %v193 = vld [vmem:[#allocation13 + $0xa0] sm:$0xff]
    %v194 = vld [vmem:[#allocation13 + $0xa8] sm:$0xff]
    %v195 = vld [vmem:[#allocation13 + $0xb0] sm:$0xff]
    %v196 = vld [vmem:[#allocation13 + $0xb8] sm:$0xff]
    %v197 = vld [vmem:[#allocation13 + $0xc0] sm:$0xff]
    %v198 = vld [vmem:[#allocation13 + $0xc8] sm:$0xff]
    %v199 = vld [vmem:[#allocation13 + $0xd0] sm:$0xff]
    %v200 = vld [vmem:[#allocation13 + $0xd8] sm:$0xff]
    %v201 = vld [vmem:[#allocation13 + $0xe0] sm:$0xff]
    %v202 = vld [vmem:[#allocation13 + $0xe8] sm:$0xff]
    %v203 = vld [vmem:[#allocation13 + $0xf0] sm:$0xff]
    %v204 = vld [vmem:[#allocation13 + $0xf8] sm:$0xff]
    %v205 = vld [vmem:[#allocation13 + $0x100] sm:$0xff]
    %v206 = vld [vmem:[#allocation13 + $0x108] sm:$0xff]
    %v207 = vld [vmem:[#allocation13 + $0x110] sm:$0xff]
    %v208 = vld [vmem:[#allocation13 + $0x118] sm:$0xff]
    %v209 = vld [vmem:[#allocation13 + $0x120] sm:$0xff]
    %v210 = vld [vmem:[#allocation13 + $0x128] sm:$0xff]
    %v211 = vld [vmem:[#allocation13 + $0x130] sm:$0xff]
    %v212 = vld [vmem:[#allocation13 + $0x138] sm:$0xff]
    %v213 = vld [vmem:[#allocation13 + $0x140] sm:$0xff]
    %v214 = vld [vmem:[#allocation13 + $0x148] sm:$0xff]
    %v215 = vld [vmem:[#allocation13 + $0x150] sm:$0xff]
    %v216 = vld [vmem:[#allocation13 + $0x158] sm:$0xff]
    %v217 = vld [vmem:[#allocation13 + $0x160] sm:$0xff]
    %v218 = vld [vmem:[#allocation13 + $0x168] sm:$0xff]
    %v219 = vld [vmem:[#allocation13 + $0x170] sm:$0xff]
    %v220 = vld [vmem:[#allocation13 + $0x178] sm:$0xff]
    %v221 = vld [vmem:[#allocation13 + $0x180] sm:$0xff]
    %v222 = vld [vmem:[#allocation13 + $0x188] sm:$0xff]
    %v223 = vld [vmem:[#allocation13 + $0x190] sm:$0xff]
    %v224 = vld [vmem:[#allocation13 + $0x198] sm:$0xff]
    %v225 = vld [vmem:[#allocation13 + $0x1a0] sm:$0xff]
    %v226 = vld [vmem:[#allocation13 + $0x1a8] sm:$0xff]
    %v227 = vld [vmem:[#allocation13 + $0x1b0] sm:$0xff]
    %v228 = vld [vmem:[#allocation13 + $0x1b8] sm:$0xff]
    %v229 = vld [vmem:[#allocation13 + $0x1c0] sm:$0xff]
    %v230 = vld [vmem:[#allocation13 + $0x1c8] sm:$0xff]
    %v231 = vld [vmem:[#allocation13 + $0x1d0] sm:$0xff]
    %v232 = vld [vmem:[#allocation13 + $0x1d8] sm:$0xff]
    %v233 = vld [vmem:[#allocation13 + $0x1e0] sm:$0xff]
    %v234 = vld [vmem:[#allocation13 + $0x1e8] sm:$0xff]
    %v235 = vld [vmem:[#allocation13 + $0x1f0] sm:$0xff]
    %v236 = vld [vmem:[#allocation13 + $0x1f8] sm:$0xff]
    %v237 = vld [vmem:[#allocation13 + $0x200] sm:$0xff]
    %v238 = vld [vmem:[#allocation13 + $0x208] sm:$0xff]
    %v239 = vld [vmem:[#allocation13 + $0x210] sm:$0xff]
    %v240 = vld [vmem:[#allocation13 + $0x218] sm:$0xff]
    %v241 = vld [vmem:[#allocation13 + $0x220] sm:$0xff]
    %v242 = vld [vmem:[#allocation13 + $0x228] sm:$0xff]
    %v243 = vld [vmem:[#allocation13 + $0x230] sm:$0xff]
    %v244 = vld [vmem:[#allocation13 + $0x238] sm:$0xff]
    %v245 = vld [vmem:[#allocation13 + $0x240] sm:$0xff]
    %v246 = vld [vmem:[#allocation13 + $0x248] sm:$0xff]
    %v247 = vld [vmem:[#allocation13 + $0x250] sm:$0xff]
    %v248 = vld [vmem:[#allocation13 + $0x258] sm:$0xff]
    %v249 = vld [vmem:[#allocation13 + $0x260] sm:$0xff]
    %v250 = vld [vmem:[#allocation13 + $0x268] sm:$0xff]
    %v251 = vld [vmem:[#allocation13 + $0x270] sm:$0xff]
    %v252 = vld [vmem:[#allocation13 + $0x278] sm:$0xff]
    %253 = vmatpush.msra.mxu0 %v248
    %254 = vmatpush.msra.mxu0 %v243
    %255 = vmatpush.msra.mxu0 %v238
    %256 = vmatpush.msra.mxu0 %v233
    %257 = vmatpush.msra.mxu0 %v228
    %258 = vmatpush.msra.mxu0 %v223
    %259 = vmatpush.msra.mxu0 %v218
    %260 = vmatpush.msra.mxu0 %v213
    %261 = vmatpush.msra.mxu0 %v208
    %262 = vmatpush.msra.mxu0 %v203
    %263 = vmatpush.msra.mxu0 %v198
    %264 = vmatpush.msra.mxu0 %v193
    %265 = vmatpush.msra.mxu0 %v188
    %266 = vmatpush.msra.mxu0 %v183
    %267 = vmatpush.msra.mxu0 %v178
    %268 = vmatpush.msra.mxu0 %v173
    %269 = vmatmul.f32.gmra.mxu0 %v172
    %v270 = vpop.f32.mrf.mxu0
    %v271 = vadd.f32 0.0, %v270
    %272 = vdwg.mxu0
    %273 = vmatpush.msra.mxu0 %v249
    %274 = vmatpush.msra.mxu0 %v244
    %275 = vmatpush.msra.mxu0 %v239
    %276 = vmatpush.msra.mxu0 %v234
    %277 = vmatpush.msra.mxu0 %v229
    %278 = vmatpush.msra.mxu0 %v224
    %279 = vmatpush.msra.mxu0 %v219
    %280 = vmatpush.msra.mxu0 %v214
    %281 = vmatpush.msra.mxu0 %v209
    %282 = vmatpush.msra.mxu0 %v204
    %283 = vmatpush.msra.mxu0 %v199
    %284 = vmatpush.msra.mxu0 %v194
    %285 = vmatpush.msra.mxu0 %v189
    %286 = vmatpush.msra.mxu0 %v184
    %287 = vmatpush.msra.mxu0 %v179
    %288 = vmatpush.msra.mxu0 %v174
    %289 = vmatmul.f32.gmra.mxu0 %v172
    %v290 = vpop.f32.mrf.mxu0
    %v291 = vadd.f32 0.0, %v290
    %292 = vdwg.mxu0
    %293 = vmatpush.msra.mxu0 %v250
    %294 = vmatpush.msra.mxu0 %v245
    %295 = vmatpush.msra.mxu0 %v240
    %296 = vmatpush.msra.mxu0 %v235
    %297 = vmatpush.msra.mxu0 %v230
    %298 = vmatpush.msra.mxu0 %v225
    %299 = vmatpush.msra.mxu0 %v220
    %300 = vmatpush.msra.mxu0 %v215
    %301 = vmatpush.msra.mxu0 %v210
    %302 = vmatpush.msra.mxu0 %v205
    %303 = vmatpush.msra.mxu0 %v200
    %304 = vmatpush.msra.mxu0 %v195
    %305 = vmatpush.msra.mxu0 %v190
    %306 = vmatpush.msra.mxu0 %v185
    %307 = vmatpush.msra.mxu0 %v180
    %308 = vmatpush.msra.mxu0 %v175
    %309 = vmatmul.f32.gmra.mxu0 %v172
    %v310 = vpop.f32.mrf.mxu0
    %v311 = vadd.f32 0.0, %v310
    %312 = vdwg.mxu0
    %313 = vmatpush.msra.mxu0 %v251
    %314 = vmatpush.msra.mxu0 %v246
    %315 = vmatpush.msra.mxu0 %v241
    %316 = vmatpush.msra.mxu0 %v236
    %317 = vmatpush.msra.mxu0 %v231
    %318 = vmatpush.msra.mxu0 %v226
    %319 = vmatpush.msra.mxu0 %v221
    %320 = vmatpush.msra.mxu0 %v216
    %321 = vmatpush.msra.mxu0 %v211
    %322 = vmatpush.msra.mxu0 %v206
    %323 = vmatpush.msra.mxu0 %v201
    %324 = vmatpush.msra.mxu0 %v196
    %325 = vmatpush.msra.mxu0 %v191
    %326 = vmatpush.msra.mxu0 %v186
    %327 = vmatpush.msra.mxu0 %v181
    %328 = vmatpush.msra.mxu0 %v176
    %329 = vmatmul.f32.gmra.mxu0 %v172
    %v330 = vpop.f32.mrf.mxu0
    %v331 = vadd.f32 0.0, %v330
    %332 = vdwg.mxu0
    %333 = vmatpush.msra.mxu0 %v252
    %334 = vmatpush.msra.mxu0 %v247
    %335 = vmatpush.msra.mxu0 %v242
    %336 = vmatpush.msra.mxu0 %v237
    %337 = vmatpush.msra.mxu0 %v232
    %338 = vmatpush.msra.mxu0 %v227
    %339 = vmatpush.msra.mxu0 %v222
    %340 = vmatpush.msra.mxu0 %v217
    %341 = vmatpush.msra.mxu0 %v212
    %342 = vmatpush.msra.mxu0 %v207
    %343 = vmatpush.msra.mxu0 %v202
    %344 = vmatpush.msra.mxu0 %v197
    %345 = vmatpush.msra.mxu0 %v192
    %346 = vmatpush.msra.mxu0 %v187
    %347 = vmatpush.msra.mxu0 %v182
    %348 = vmatpush.msra.mxu0 %v177
    %349 = vmatmul.f32.gmra.mxu0 %v172
    %v350 = vpop.f32.mrf.mxu0
    %v351 = vadd.f32 0.0, %v350
    %352 = vdwg.mxu0
    %vm353 = vcmask 261120
    %v355 = vsel %vm353, %v151, 0
    %357 = vmatpush.msra.mxu0 0.0
    %358 = vmatpush.msra.mxu0 0.0
    %359 = vmatpush.msra.mxu0 0.0
    %360 = vmatpush.msra.mxu0 0.0
    %361 = vmatpush.msra.mxu0 0.0
    %362 = vmatpush.msra.mxu0 0.0
    %363 = vmatpush.msra.mxu0 0.0
    %364 = vmatpush.msra.mxu0 0.0
    %365 = vmatpush.msra.mxu0 0.0
    %366 = vmatpush.msra.mxu0 0.0
    %367 = vmatpush.msra.mxu0 0.0
    %368 = vmatpush.msra.mxu0 0.0
    %369 = vmatpush.msra.mxu0 %v167
    %370 = vmatpush.msra.mxu0 %v162
    %371 = vmatpush.msra.mxu0 %v157
    %372 = vmatpush.msra.mxu0 %v152
    %373 = vmatmul.f32.gmra.mxu0 %v355
    %v374 = vpop.f32.mrf.mxu0
    %v375 = vadd.f32 %v271, %v374
    %376 = vdwg.mxu0
    %377 = vmatpush.msra.mxu0 0.0
    %378 = vmatpush.msra.mxu0 0.0
    %379 = vmatpush.msra.mxu0 0.0
    %380 = vmatpush.msra.mxu0 0.0
    %381 = vmatpush.msra.mxu0 0.0
    %382 = vmatpush.msra.mxu0 0.0
    %383 = vmatpush.msra.mxu0 0.0
    %384 = vmatpush.msra.mxu0 0.0
    %385 = vmatpush.msra.mxu0 0.0
    %386 = vmatpush.msra.mxu0 0.0
    %387 = vmatpush.msra.mxu0 0.0
    %388 = vmatpush.msra.mxu0 0.0
    %389 = vmatpush.msra.mxu0 %v168
    %390 = vmatpush.msra.mxu0 %v163
    %391 = vmatpush.msra.mxu0 %v158
    %392 = vmatpush.msra.mxu0 %v153
    %393 = vmatmul.f32.gmra.mxu0 %v355
    %v394 = vpop.f32.mrf.mxu0
    %v395 = vadd.f32 %v291, %v394
    %396 = vdwg.mxu0
    %397 = vmatpush.msra.mxu0 0.0
    %398 = vmatpush.msra.mxu0 0.0
    %399 = vmatpush.msra.mxu0 0.0
    %400 = vmatpush.msra.mxu0 0.0
    %401 = vmatpush.msra.mxu0 0.0
    %402 = vmatpush.msra.mxu0 0.0
    %403 = vmatpush.msra.mxu0 0.0
    %404 = vmatpush.msra.mxu0 0.0
    %405 = vmatpush.msra.mxu0 0.0
    %406 = vmatpush.msra.mxu0 0.0
    %407 = vmatpush.msra.mxu0 0.0
    %408 = vmatpush.msra.mxu0 0.0
    %409 = vmatpush.msra.mxu0 %v169
    %410 = vmatpush.msra.mxu0 %v164
    %411 = vmatpush.msra.mxu0 %v159
    %412 = vmatpush.msra.mxu0 %v154
    %413 = vmatmul.f32.gmra.mxu0 %v355
    %v414 = vpop.f32.mrf.mxu0
    %v415 = vadd.f32 %v311, %v414
    %416 = vdwg.mxu0
    %417 = vmatpush.msra.mxu0 0.0
    %418 = vmatpush.msra.mxu0 0.0
    %419 = vmatpush.msra.mxu0 0.0
    %420 = vmatpush.msra.mxu0 0.0
    %421 = vmatpush.msra.mxu0 0.0
    %422 = vmatpush.msra.mxu0 0.0
    %423 = vmatpush.msra.mxu0 0.0
    %424 = vmatpush.msra.mxu0 0.0
    %425 = vmatpush.msra.mxu0 0.0
    %426 = vmatpush.msra.mxu0 0.0
    %427 = vmatpush.msra.mxu0 0.0
    %428 = vmatpush.msra.mxu0 0.0
    %429 = vmatpush.msra.mxu0 %v170
    %430 = vmatpush.msra.mxu0 %v165
    %431 = vmatpush.msra.mxu0 %v160
    %432 = vmatpush.msra.mxu0 %v155
    %433 = vmatmul.f32.gmra.mxu0 %v355
    %v434 = vpop.f32.mrf.mxu0
    %v435 = vadd.f32 %v331, %v434
    %436 = vdwg.mxu0
    %437 = vmatpush.msra.mxu0 0.0
    %438 = vmatpush.msra.mxu0 0.0
    %439 = vmatpush.msra.mxu0 0.0
    %440 = vmatpush.msra.mxu0 0.0
    %441 = vmatpush.msra.mxu0 0.0
    %442 = vmatpush.msra.mxu0 0.0
    %443 = vmatpush.msra.mxu0 0.0
    %444 = vmatpush.msra.mxu0 0.0
    %445 = vmatpush.msra.mxu0 0.0
    %446 = vmatpush.msra.mxu0 0.0
    %447 = vmatpush.msra.mxu0 0.0
    %448 = vmatpush.msra.mxu0 0.0
    %449 = vmatpush.msra.mxu0 %v171
    %450 = vmatpush.msra.mxu0 %v166
    %451 = vmatpush.msra.mxu0 %v161
    %452 = vmatpush.msra.mxu0 %v156
    %453 = vmatmul.f32.gmra.mxu0 %v355
    %v454 = vpop.f32.mrf.mxu0
    %v455 = vadd.f32 %v351, %v454
    %456 = vdwg.mxu0
    %v457 = vld [vmem:[#allocation7] sm:$0xff]
    %v458 = vld [vmem:[#allocation14] sm:$0xff]
    %v459 = vld [vmem:[#allocation14 + $0x8] sm:$0xff]
    %v460 = vld [vmem:[#allocation14 + $0x10] sm:$0xff]
    %v461 = vld [vmem:[#allocation14 + $0x18] sm:$0xff]
    %v462 = vld [vmem:[#allocation14 + $0x20] sm:$0xff]
    %v463 = vld [vmem:[#allocation14 + $0x28] sm:$0xff]
    %v464 = vld [vmem:[#allocation14 + $0x30] sm:$0xff]
    %v465 = vld [vmem:[#allocation14 + $0x38] sm:$0xff]
    %v466 = vld [vmem:[#allocation14 + $0x40] sm:$0xff]
    %v467 = vld [vmem:[#allocation14 + $0x48] sm:$0xff]
    %v468 = vld [vmem:[#allocation14 + $0x50] sm:$0xff]
    %v469 = vld [vmem:[#allocation14 + $0x58] sm:$0xff]
    %v470 = vld [vmem:[#allocation14 + $0x60] sm:$0xff]
    %v471 = vld [vmem:[#allocation14 + $0x68] sm:$0xff]
    %v472 = vld [vmem:[#allocation14 + $0x70] sm:$0xff]
    %v473 = vld [vmem:[#allocation14 + $0x78] sm:$0xff]
    %v474 = vld [vmem:[#allocation14 + $0x80] sm:$0xff]
    %v475 = vld [vmem:[#allocation14 + $0x88] sm:$0xff]
    %v476 = vld [vmem:[#allocation14 + $0x90] sm:$0xff]
    %v477 = vld [vmem:[#allocation14 + $0x98] sm:$0xff]
    %v478 = vld [vmem:[#allocation14 + $0xa0] sm:$0xff]
    %v479 = vld [vmem:[#allocation14 + $0xa8] sm:$0xff]
    %v480 = vld [vmem:[#allocation14 + $0xb0] sm:$0xff]
    %v481 = vld [vmem:[#allocation14 + $0xb8] sm:$0xff]
    %v482 = vld [vmem:[#allocation14 + $0xc0] sm:$0xff]
    %v483 = vld [vmem:[#allocation14 + $0xc8] sm:$0xff]
    %v484 = vld [vmem:[#allocation14 + $0xd0] sm:$0xff]
    %v485 = vld [vmem:[#allocation14 + $0xd8] sm:$0xff]
    %v486 = vld [vmem:[#allocation14 + $0xe0] sm:$0xff]
    %v487 = vld [vmem:[#allocation14 + $0xe8] sm:$0xff]
    %v488 = vld [vmem:[#allocation14 + $0xf0] sm:$0xff]
    %v489 = vld [vmem:[#allocation14 + $0xf8] sm:$0xff]
    %v490 = vld [vmem:[#allocation14 + $0x100] sm:$0xff]
    %v491 = vld [vmem:[#allocation14 + $0x108] sm:$0xff]
    %v492 = vld [vmem:[#allocation14 + $0x110] sm:$0xff]
    %v493 = vld [vmem:[#allocation14 + $0x118] sm:$0xff]
    %v494 = vld [vmem:[#allocation14 + $0x120] sm:$0xff]
    %v495 = vld [vmem:[#allocation14 + $0x128] sm:$0xff]
    %v496 = vld [vmem:[#allocation14 + $0x130] sm:$0xff]
    %v497 = vld [vmem:[#allocation14 + $0x138] sm:$0xff]
    %v498 = vld [vmem:[#allocation14 + $0x140] sm:$0xff]
    %v499 = vld [vmem:[#allocation14 + $0x148] sm:$0xff]
    %v500 = vld [vmem:[#allocation14 + $0x150] sm:$0xff]
    %v501 = vld [vmem:[#allocation14 + $0x158] sm:$0xff]
    %v502 = vld [vmem:[#allocation14 + $0x160] sm:$0xff]
    %v503 = vld [vmem:[#allocation14 + $0x168] sm:$0xff]
    %v504 = vld [vmem:[#allocation14 + $0x170] sm:$0xff]
    %v505 = vld [vmem:[#allocation14 + $0x178] sm:$0xff]
    %v506 = vld [vmem:[#allocation14 + $0x180] sm:$0xff]
    %v507 = vld [vmem:[#allocation14 + $0x188] sm:$0xff]
    %v508 = vld [vmem:[#allocation14 + $0x190] sm:$0xff]
    %v509 = vld [vmem:[#allocation14 + $0x198] sm:$0xff]
    %v510 = vld [vmem:[#allocation14 + $0x1a0] sm:$0xff]
    %v511 = vld [vmem:[#allocation14 + $0x1a8] sm:$0xff]
    %v512 = vld [vmem:[#allocation14 + $0x1b0] sm:$0xff]
    %v513 = vld [vmem:[#allocation14 + $0x1b8] sm:$0xff]
    %v514 = vld [vmem:[#allocation14 + $0x1c0] sm:$0xff]
    %v515 = vld [vmem:[#allocation14 + $0x1c8] sm:$0xff]
    %v516 = vld [vmem:[#allocation14 + $0x1d0] sm:$0xff]
    %v517 = vld [vmem:[#allocation14 + $0x1d8] sm:$0xff]
    %v518 = vld [vmem:[#allocation14 + $0x1e0] sm:$0xff]
    %v519 = vld [vmem:[#allocation14 + $0x1e8] sm:$0xff]
    %v520 = vld [vmem:[#allocation14 + $0x1f0] sm:$0xff]
    %v521 = vld [vmem:[#allocation14 + $0x1f8] sm:$0xff]
    %v522 = vld [vmem:[#allocation14 + $0x200] sm:$0xff]
    %v523 = vld [vmem:[#allocation14 + $0x208] sm:$0xff]
    %v524 = vld [vmem:[#allocation14 + $0x210] sm:$0xff]
    %v525 = vld [vmem:[#allocation14 + $0x218] sm:$0xff]
    %v526 = vld [vmem:[#allocation14 + $0x220] sm:$0xff]
    %v527 = vld [vmem:[#allocation14 + $0x228] sm:$0xff]
    %v528 = vld [vmem:[#allocation14 + $0x230] sm:$0xff]
    %v529 = vld [vmem:[#allocation14 + $0x238] sm:$0xff]
    %v530 = vld [vmem:[#allocation14 + $0x240] sm:$0xff]
    %v531 = vld [vmem:[#allocation14 + $0x248] sm:$0xff]
    %v532 = vld [vmem:[#allocation14 + $0x250] sm:$0xff]
    %v533 = vld [vmem:[#allocation14 + $0x258] sm:$0xff]
    %v534 = vld [vmem:[#allocation14 + $0x260] sm:$0xff]
    %v535 = vld [vmem:[#allocation14 + $0x268] sm:$0xff]
    %v536 = vld [vmem:[#allocation14 + $0x270] sm:$0xff]
    %v537 = vld [vmem:[#allocation14 + $0x278] sm:$0xff]
    %538 = vmatpush.msra.mxu0 %v533
    %539 = vmatpush.msra.mxu0 %v528
    %540 = vmatpush.msra.mxu0 %v523
    %541 = vmatpush.msra.mxu0 %v518
    %542 = vmatpush.msra.mxu0 %v513
    %543 = vmatpush.msra.mxu0 %v508
    %544 = vmatpush.msra.mxu0 %v503
    %545 = vmatpush.msra.mxu0 %v498
    %546 = vmatpush.msra.mxu0 %v493
    %547 = vmatpush.msra.mxu0 %v488
    %548 = vmatpush.msra.mxu0 %v483
    %549 = vmatpush.msra.mxu0 %v478
    %550 = vmatpush.msra.mxu0 %v473
    %551 = vmatpush.msra.mxu0 %v468
    %552 = vmatpush.msra.mxu0 %v463
    %553 = vmatpush.msra.mxu0 %v458
    %554 = vmatmul.f32.gmra.mxu0 %v457
    %v555 = vpop.f32.mrf.mxu0
    %v556 = vadd.f32 0.0, %v555
    %557 = vdwg.mxu0
    %558 = vmatpush.msra.mxu0 %v534
    %559 = vmatpush.msra.mxu0 %v529
    %560 = vmatpush.msra.mxu0 %v524
    %561 = vmatpush.msra.mxu0 %v519
    %562 = vmatpush.msra.mxu0 %v514
    %563 = vmatpush.msra.mxu0 %v509
    %564 = vmatpush.msra.mxu0 %v504
    %565 = vmatpush.msra.mxu0 %v499
    %566 = vmatpush.msra.mxu0 %v494
    %567 = vmatpush.msra.mxu0 %v489
    %568 = vmatpush.msra.mxu0 %v484
    %569 = vmatpush.msra.mxu0 %v479
    %570 = vmatpush.msra.mxu0 %v474
    %571 = vmatpush.msra.mxu0 %v469
    %572 = vmatpush.msra.mxu0 %v464
    %573 = vmatpush.msra.mxu0 %v459
    %574 = vmatmul.f32.gmra.mxu0 %v457
    %v575 = vpop.f32.mrf.mxu0
    %v576 = vadd.f32 0.0, %v575
    %577 = vdwg.mxu0
    %578 = vmatpush.msra.mxu0 %v535
    %579 = vmatpush.msra.mxu0 %v530
    %580 = vmatpush.msra.mxu0 %v525
    %581 = vmatpush.msra.mxu0 %v520
    %582 = vmatpush.msra.mxu0 %v515
    %583 = vmatpush.msra.mxu0 %v510
    %584 = vmatpush.msra.mxu0 %v505
    %585 = vmatpush.msra.mxu0 %v500
    %586 = vmatpush.msra.mxu0 %v495
    %587 = vmatpush.msra.mxu0 %v490
    %588 = vmatpush.msra.mxu0 %v485
    %589 = vmatpush.msra.mxu0 %v480
    %590 = vmatpush.msra.mxu0 %v475
    %591 = vmatpush.msra.mxu0 %v470
    %592 = vmatpush.msra.mxu0 %v465
    %593 = vmatpush.msra.mxu0 %v460
    %594 = vmatmul.f32.gmra.mxu0 %v457
    %v595 = vpop.f32.mrf.mxu0
    %v596 = vadd.f32 0.0, %v595
    %597 = vdwg.mxu0
    %598 = vmatpush.msra.mxu0 %v536
    %599 = vmatpush.msra.mxu0 %v531
    %600 = vmatpush.msra.mxu0 %v526
    %601 = vmatpush.msra.mxu0 %v521
    %602 = vmatpush.msra.mxu0 %v516
    %603 = vmatpush.msra.mxu0 %v511
    %604 = vmatpush.msra.mxu0 %v506
    %605 = vmatpush.msra.mxu0 %v501
    %606 = vmatpush.msra.mxu0 %v496
    %607 = vmatpush.msra.mxu0 %v491
    %608 = vmatpush.msra.mxu0 %v486
    %609 = vmatpush.msra.mxu0 %v481
    %610 = vmatpush.msra.mxu0 %v476
    %611 = vmatpush.msra.mxu0 %v471
    %612 = vmatpush.msra.mxu0 %v466
    %613 = vmatpush.msra.mxu0 %v461
    %614 = vmatmul.f32.gmra.mxu0 %v457
    %v615 = vpop.f32.mrf.mxu0
    %v616 = vadd.f32 0.0, %v615
    %617 = vdwg.mxu0
    %618 = vmatpush.msra.mxu0 %v537
    %619 = vmatpush.msra.mxu0 %v532
    %620 = vmatpush.msra.mxu0 %v527
    %621 = vmatpush.msra.mxu0 %v522
    %622 = vmatpush.msra.mxu0 %v517
    %623 = vmatpush.msra.mxu0 %v512
    %624 = vmatpush.msra.mxu0 %v507
    %625 = vmatpush.msra.mxu0 %v502
    %626 = vmatpush.msra.mxu0 %v497
    %627 = vmatpush.msra.mxu0 %v492
    %628 = vmatpush.msra.mxu0 %v487
    %629 = vmatpush.msra.mxu0 %v482
    %630 = vmatpush.msra.mxu0 %v477
    %631 = vmatpush.msra.mxu0 %v472
    %632 = vmatpush.msra.mxu0 %v467
    %633 = vmatpush.msra.mxu0 %v462
    %634 = vmatmul.f32.gmra.mxu0 %v457
    %v635 = vpop.f32.mrf.mxu0
    %v636 = vadd.f32 0.0, %v635
    %637 = vdwg.mxu0
    %v638 = vadd.f32 %v375, %v556
    %v639 = vadd.f32 %v395, %v576
    %v640 = vadd.f32 %v415, %v596
    %v641 = vadd.f32 %v435, %v616
    %v642 = vadd.f32 %v455, %v636
    %v643 = vld [vmem:[%s8] sm:$0x1f]
    %v645 = vperm.slane %v643, 0
    %v646 = vperm.slane %v643, 1
    %v647 = vperm.slane %v643, 2
    %v648 = vperm.slane %v643, 3
    %v649 = vperm.slane %v643, 4
    %v655 = vadd.f32 %v638, %v645
    %v656 = vadd.f32 %v639, %v646
    %v657 = vadd.f32 %v640, %v647
    %v658 = vadd.f32 %v641, %v648
    %v659 = vadd.f32 %v642, %v649
    %v660 = vmul.f32 %v655, 0.5
    %v661 = vmul.f32 %v656, 0.5
    %v662 = vmul.f32 %v657, 0.5
    %v663 = vmul.f32 %v658, 0.5
    %v664 = vtanh.pop %v660
    %v665 = vtanh.pop %v661
    %v666 = vtanh.pop %v662
    %v667 = vtanh.pop %v663
    %v668 = vmul.f32 %v664, 0.5
    %v669 = vmul.f32 %v665, 0.5
    %v670 = vmul.f32 %v666, 0.5
    %v671 = vmul.f32 %v667, 0.5
    %v672 = vadd.f32 %v668, 0.5
    %v673 = vadd.f32 %v669, 0.5
    %v674 = vadd.f32 %v670, 0.5
    %v675 = vadd.f32 %v671, 0.5
    %v676 = vtanh.pop %v659
    %v677 = vld [vmem:[#allocation8] sm:$0xff]
    %v678 = vmul.f32 %v677, %v673
    %v679 = vld [vmem:[#allocation10] sm:$0xff]
    %v680 = vmul.f32 %v679, %v674
    %v681 = vadd.f32 %v678, %v680
    %v682 = vmul.f32 %v672, %v676
    %v683 = vadd.f32 %v681, %v682
    %v684 = vmul.f32 %v675, %v683
    %v685 = vtanh.pop %v684
    %686 = vst [vmem:[#allocation16] sm:$0xff] %v685
    %687 = vst [vmem:[#allocation17] sm:$0xff] %v683
    // Predicated region
    $region70: #{tpu_custom_call.1} parent=1 // pred_check
      _
    $region71: #{tpu_custom_call.1} parent=1 // pred_check_branch
      %689 = sbr.rel (0) target = $region73
    $region72: #{tpu_custom_call.1} parent=1 // pred_region
      %691 = vsyncadd [#allocation4], 0
      %s693 = sshll.u32 [#allocation16], 4
      %s694 = int_to_ptr.vmem [resolvable:$true] %s693
      %s695 = sshll.u32 %s9, 4
      %s696 = int_to_ptr.hbm [resolvable:$true] %s695
      %698 = dma.vmem_to_hbm [thread:$0]  %s694, 128, %s696, [#allocation4]
    $region73: #{tpu_custom_call.1} parent=1 // pred_fallthru
      _
    // Predicated region
    $region74: #{tpu_custom_call.1} parent=1 // pred_check
      _
    $region75: #{tpu_custom_call.1} parent=1 // pred_check_branch
      %700 = sbr.rel (0) target = $region77
    $region76: #{tpu_custom_call.1} parent=1 // pred_region
      %702 = vsyncadd [#allocation18], 0
      %s704 = sshll.u32 [#allocation17], 4
      %s705 = int_to_ptr.vmem [resolvable:$true] %s704
      %s706 = sshll.u32 %s10, 4
      %s707 = int_to_ptr.hbm [resolvable:$true] %s706
      %709 = dma.vmem_to_hbm [thread:$0]  %s705, 128, %s707, [#allocation18]
    $region77: #{tpu_custom_call.1} parent=1 // pred_fallthru
      _
    // Predicated region
    $region78: #{tpu_custom_call.1} parent=1 // pred_check
      _
    $region79: #{tpu_custom_call.1} parent=1 // pred_check_branch
      %711 = sbr.rel (0) target = $region81
    $region80: #{tpu_custom_call.1} parent=1 // pred_region
      %713 = dma.done [#allocation4], 128
    $region81: #{tpu_custom_call.1} parent=1 // pred_fallthru
      _
    // Predicated region
    $region82: #{tpu_custom_call.1} parent=1 // pred_check
      _
    $region83: #{tpu_custom_call.1} parent=1 // pred_check_branch
      %715 = sbr.rel (0) target = $region85
    $region84: #{tpu_custom_call.1} parent=1 // pred_region
      %717 = dma.done [#allocation18], 128
    $region85: #{tpu_custom_call.1} parent=1 // pred_fallthru
      _
    %718 = vsyncpa [#allocation3], 1
    %719 = vsyncpa [#allocation6], 1
    %720 = vsyncpa [#allocation9], 1
    %721 = vsyncpa [#allocation12], 1
    %722 = vsyncpa [#allocation15], 1
    %723 = vsyncpa [#allocation4], 1
    %724 = vsyncpa [#allocation18], 1

</llo_original>
